<compile_context>
chip_gen: v6e
topology: v6e:2x2x1
jax: 0.10.0
libtpu: 0.0.40
codegen_flags: <defaults>
</compile_context>

<pallas_src>
import functools

import jax
import jax.numpy as jnp
from jax.experimental import pallas as pl
from jax.experimental.pallas import tpu as pltpu


def _round_up(x, m):
    return ((x + m - 1) // m) * m


# ----------------------------------------------------------------------------
# Kernel
# ----------------------------------------------------------------------------
def fused_actor_critic_kernel(x_ref, slab_ref, out_ref, *, sp, action_dim):
    """x_ref: (Bp, Sp) padded state; slab_ref: (Sp+408, 256) packed params;
    out_ref: (Bp, 128) lane-dense output (mean cols 0..action_dim-1, value col action_dim)."""
    x = x_ref[...]                                    # (Bp, Sp)

    # Static slab layout (all row offsets are multiples of 8 -> sublane aligned).
    w1 = slab_ref[0:sp, :]                            # (Sp, 256)  = [aw1 | cw1]
    b1 = slab_ref[sp:sp + 1, :]                       # (1, 256)   = [ab1 | cb1]
    w2 = slab_ref[sp + 8:sp + 264, 0:128]             # (256, 128) = blockdiag(aw2, cw2)
    b2 = slab_ref[sp + 264:sp + 265, 0:128]           # (1, 128)   = [ab2 | cb2]
    w3 = slab_ref[sp + 272:sp + 400, 0:128]           # (128, 128) = blockdiag(aw3, cw3), zero-padded
    b3 = slab_ref[sp + 400:sp + 401, 0:128]           # (1, 128)   = [ab3 | cb3 | 0...]

    # Layer 1 (both branches tanh).
    h = jnp.tanh(jnp.dot(x, w1, preferred_element_type=jnp.float32) + b1)     # (Bp, 256)
    # Layer 2 (both branches tanh).
    h = jnp.tanh(jnp.dot(h, w2, preferred_element_type=jnp.float32) + b2)     # (Bp, 128)
    # Layer 3: actor columns get tanh, critic value column stays linear.
    y = jnp.dot(h, w3, preferred_element_type=jnp.float32) + b3               # (Bp, 128)
    col = jax.lax.broadcasted_iota(jnp.int32, y.shape, dimension=1)
    # clamp(-1, 1) after tanh is a no-op and is dropped.
    out_ref[...] = jnp.where(col < action_dim, jnp.tanh(y), y)


# ----------------------------------------------------------------------------
# Parameters (mirror ActorCritic._init_weights: orthogonal(gain=0.01), zero bias)
# ----------------------------------------------------------------------------
def make_params(key, state_dim, action_dim):
    ortho = jax.nn.initializers.orthogonal(scale=0.01)
    keys = jax.random.split(key, 6)

    def lin(k, in_f, out_f):
        # PyTorch weight is (out, in); store transposed (in, out) so y = x @ W + b.
        w = ortho(k, (out_f, in_f), jnp.float32).T
        b = jnp.zeros((1, out_f), jnp.float32)
        return w, b

    aw1, ab1 = lin(keys[0], state_dim, 128)
    aw2, ab2 = lin(keys[1], 128, 64)
    aw3, ab3 = lin(keys[2], 64, action_dim)
    cw1, cb1 = lin(keys[3], state_dim, 128)
    cw2, cb2 = lin(keys[4], 128, 64)
    cw3, cb3 = lin(keys[5], 64, 1)
    return (aw1, ab1, aw2, ab2, aw3, ab3, cw1, cb1, cw2, cb2, cw3, cb3)


def pack_params(params, state_dim, action_dim):
    """Pack all 12 parameter tensors into one lane-aligned (Sp+408, 256) f32 slab."""
    aw1, ab1, aw2, ab2, aw3, ab3, cw1, cb1, cw2, cb2, cw3, cb3 = params
    sp = _round_up(state_dim, 8)

    w1 = (jnp.zeros((sp, 256), jnp.float32)
          .at[:state_dim, :128].set(aw1)
          .at[:state_dim, 128:].set(cw1))
    b1 = jnp.zeros((8, 256), jnp.float32).at[0:1, :128].set(ab1).at[0:1, 128:].set(cb1)

    w2 = (jnp.zeros((256, 128), jnp.float32)
          .at[:128, :64].set(aw2)
          .at[128:, 64:].set(cw2))
    b2 = jnp.zeros((8, 128), jnp.float32).at[0:1, :64].set(ab2).at[0:1, 64:].set(cb2)

    w3 = (jnp.zeros((128, 128), jnp.float32)
          .at[:64, :action_dim].set(aw3)
          .at[64:, action_dim:action_dim + 1].set(cw3))
    b3 = (jnp.zeros((8, 128), jnp.float32)
          .at[0:1, :action_dim].set(ab3)
          .at[0:1, action_dim:action_dim + 1].set(cb3))

    def pad256(a):
        return jnp.pad(a, ((0, 0), (0, 256 - a.shape[1])))

    slab = jnp.concatenate([w1, b1, pad256(w2), pad256(b2), pad256(w3), pad256(b3)], axis=0)
    return slab  # (sp + 408, 256)


# ----------------------------------------------------------------------------
# Wrapper
# ----------------------------------------------------------------------------
def actor_critic_forward(state, slab, state_dim, action_dim):
    assert action_dim + 1 <= 128, "fused output slab assumes action_dim + 1 <= 128"
    batch = state.shape[0]
    bp = _round_up(max(batch, 8), 8)
    sp = _round_up(state_dim, 8)

    # Pad state to (Bp, Sp); padded rows/cols are zero and contribute nothing.
    x = jnp.zeros((bp, sp), jnp.float32).at[:batch, :state_dim].set(state)

    vmem = pl.BlockSpec(memory_space=pltpu.MemorySpace.VMEM)
    out = pl.pallas_call(
        functools.partial(fused_actor_critic_kernel, sp=sp, action_dim=action_dim),
        out_shape=jax.ShapeDtypeStruct((bp, 128), jnp.float32),
        in_specs=[vmem, vmem],
        out_specs=vmem,
    )(x, slab)

    mean = out[:batch, :action_dim]
    value = out[:batch, action_dim:action_dim + 1]
    # cov_mat: constant diag(0.5) — plain JAX glue (matches self.cov_mat).
    cov_mat = jnp.diag(jnp.full((action_dim,), 0.5, dtype=jnp.float32))
    return mean, cov_mat, value


# TODO(synk): get_action's MultivariateNormal sample/log_prob is distribution glue
# (no Pallas equivalent needed); it can be done in plain JAX on top of (mean, cov_mat).


# ----------------------------------------------------------------------------
# Test
# ----------------------------------------------------------------------------
def _reference(x, params):
    """Pure-JAX unfused reference mirroring the PyTorch forward."""
    aw1, ab1, aw2, ab2, aw3, ab3, cw1, cb1, cw2, cb2, cw3, cb3 = params
    hp = jax.lax.Precision.HIGHEST
    h = jnp.tanh(jnp.dot(x, aw1, precision=hp) + ab1)
    h = jnp.tanh(jnp.dot(h, aw2, precision=hp) + ab2)
    m = jnp.clip(jnp.tanh(jnp.dot(h, aw3, precision=hp) + ab3), -1.0, 1.0)
    g = jnp.tanh(jnp.dot(x, cw1, precision=hp) + cb1)
    g = jnp.tanh(jnp.dot(g, cw2, precision=hp) + cb2)
    v = jnp.dot(g, cw3, precision=hp) + cb3
    return m, v


if __name__ == "__main__":
    state_dim = 16
    action_dim = 4
    batch = 8

    key = jax.random.PRNGKey(0)
    k_param, k_state = jax.random.split(key)

    params = make_params(k_param, state_dim, action_dim)
    slab = pack_params(params, state_dim, action_dim)
    state = jax.random.normal(k_state, (batch, state_dim), dtype=jnp.float32)

    mean, cov_mat, value = actor_critic_forward(state, slab, state_dim, action_dim)
    jax.block_until_ready((mean, cov_mat, value))

    # --- check 1: exact module semantics (orthogonal gain=0.01 init) ----------
    m_ref, v_ref = _reference(state, params)
    assert mean.shape == (batch, action_dim)
    assert value.shape == (batch, 1)
    assert cov_mat.shape == (action_dim, action_dim)
    assert jnp.allclose(mean, m_ref, atol=1e-5)
    assert jnp.allclose(value, v_ref, atol=1e-5)

    # --- check 2: scaled-up weights so values are O(1) (meaningful numerics) --
    big_params = tuple(p * 50.0 for p in params)
    big_slab = pack_params(big_params, state_dim, action_dim)
    m2, _, v2 = actor_critic_forward(state, big_slab, state_dim, action_dim)
    jax.block_until_ready((m2, v2))
    m2_ref, v2_ref = _reference(state, big_params)
    assert jnp.allclose(m2, m2_ref, atol=2e-3, rtol=2e-3)
    assert jnp.allclose(v2, v2_ref, atol=2e-3, rtol=2e-3)

    print("KERNEL_OK")
</pallas_src>

<mosaic_0001>
module attributes {stable_mosaic.version = 11 : i64} {
  func.func @fused_actor_critic_kernel(%arg0: memref<8x16xf32, #tpu.memory_space<vmem>>, %arg1: memref<424x256xf32, #tpu.memory_space<vmem>>, %arg2: memref<8x128xf32, #tpu.memory_space<vmem>>) attributes {dimension_semantics = [], scalar_prefetch = 0 : i64, scratch_operands = 0 : i64, tpu.core_type = #tpu.core_type<tc>} {
    %c0 = arith.constant 0 : index
    %c0_0 = arith.constant 0 : index
    %0 = vector.load %arg0[%c0, %c0_0] : memref<8x16xf32, #tpu.memory_space<vmem>>, vector<8x16xf32>
    %c0_1 = arith.constant 0 : index
    %c0_2 = arith.constant 0 : index
    %1 = vector.load %arg1[%c0_1, %c0_2] : memref<424x256xf32, #tpu.memory_space<vmem>>, vector<16x256xf32>
    %c16 = arith.constant 16 : index
    %c0_3 = arith.constant 0 : index
    %2 = vector.load %arg1[%c16, %c0_3] : memref<424x256xf32, #tpu.memory_space<vmem>>, vector<1x256xf32>
    %c24 = arith.constant 24 : index
    %c0_4 = arith.constant 0 : index
    %3 = vector.load %arg1[%c24, %c0_4] : memref<424x256xf32, #tpu.memory_space<vmem>>, vector<256x128xf32>
    %c280 = arith.constant 280 : index
    %c0_5 = arith.constant 0 : index
    %4 = vector.load %arg1[%c280, %c0_5] : memref<424x256xf32, #tpu.memory_space<vmem>>, vector<1x128xf32>
    %c288 = arith.constant 288 : index
    %c0_6 = arith.constant 0 : index
    %5 = vector.load %arg1[%c288, %c0_6] : memref<424x256xf32, #tpu.memory_space<vmem>>, vector<128x128xf32>
    %c416 = arith.constant 416 : index
    %c0_7 = arith.constant 0 : index
    %6 = vector.load %arg1[%c416, %c0_7] : memref<424x256xf32, #tpu.memory_space<vmem>>, vector<1x128xf32>
    %cst = arith.constant dense<0.000000e+00> : vector<8x256xf32>
    %7 = tpu.matmul %0, %1, %cst {dimension_numbers = #tpu.dot_dimension_numbers<[1], [0], [0], [1], [0, 0, 1, 1], [], []>} : vector<8x16xf32>, vector<16x256xf32>, vector<8x256xf32> -> vector<8x256xf32>
    %8 = vector.broadcast %2 : vector<1x256xf32> to vector<8x256xf32>
    %9 = arith.addf %7, %8 : vector<8x256xf32>
    %10 = math.tanh %9 : vector<8x256xf32>
    %cst_8 = arith.constant dense<0.000000e+00> : vector<8x128xf32>
    %11 = tpu.matmul %10, %3, %cst_8 {dimension_numbers = #tpu.dot_dimension_numbers<[1], [0], [0], [1], [0, 0, 1, 1], [], []>} : vector<8x256xf32>, vector<256x128xf32>, vector<8x128xf32> -> vector<8x128xf32>
    %12 = vector.broadcast %4 : vector<1x128xf32> to vector<8x128xf32>
    %13 = arith.addf %11, %12 : vector<8x128xf32>
    %14 = math.tanh %13 : vector<8x128xf32>
    %cst_9 = arith.constant dense<0.000000e+00> : vector<8x128xf32>
    %15 = tpu.matmul %14, %5, %cst_9 {dimension_numbers = #tpu.dot_dimension_numbers<[1], [0], [0], [1], [0, 0, 1, 1], [], []>} : vector<8x128xf32>, vector<128x128xf32>, vector<8x128xf32> -> vector<8x128xf32>
    %16 = vector.broadcast %6 : vector<1x128xf32> to vector<8x128xf32>
    %17 = arith.addf %15, %16 : vector<8x128xf32>
    %18 = tpu.iota {dimensions = array<i32: 1>} : vector<8x128xi32>
    %c4_i32 = arith.constant 4 : i32
    %19 = vector.broadcast %c4_i32 : i32 to vector<8x128xi32>
    %20 = arith.cmpi slt, %18, %19 : vector<8x128xi32>
    %21 = math.tanh %17 : vector<8x128xf32>
    %22 = arith.select %20, %21, %17 : vector<8x128xi1>, vector<8x128xf32>
    %c0_10 = arith.constant 0 : index
    %c0_11 = arith.constant 0 : index
    %23 = vector.load %arg2[%c0_10, %c0_11] : memref<8x128xf32, #tpu.memory_space<vmem>>, vector<8x128xf32>
    tpu.vector_store %arg2[%c0_10, %c0_11], %22 {strides = array<i32>} : memref<8x128xf32, #tpu.memory_space<vmem>>, vector<8x128xf32>,
    return
  }
}

</mosaic_0001>

<llo_original>
// kernel: tpu_custom_call.1
$region0: #{tpu_custom_call.1}
  #allocation0 [shape = 'u32[]', space=smem, size = 0x4, offset = 0x4, fixed_abs, tag = 'smem constant byte address 0x4 - core index']
  #allocation1 [shape = 'u32[144,128]{1,0:T(1,128)}', space=vmem, size = 0x12000, scoped, tag = 'internal scratch']
  %s0 = inlined_call_operand.hbm [shape: f32[8,16], index: 0, kind: input, shape index: {}]
  %s1 = inlined_call_operand.hbm [shape: f32[424,256], index: 1, kind: input, shape index: {}]
  %s2 = inlined_call_operand.hbm [shape: f32[8,128], index: 2, kind: output, shape index: {}]
  %s3 = sld [smem:[#allocation0]]
  $region26: #{tpu_custom_call.1} parent=0
    _
  %s5 = ssub.s32 1, %s3
  %s6 = scalar_select 0, %s5, %s3
  $region1: #{tpu_custom_call.1} parent=0
    #allocation2 [shape = 'u8[4096]{0}', space=vmem, size = 0x1000, scoped, tag = 'input window, operand 0, single buffered']
    #allocation3 [shape = 's32[1]{0}', space=sflag, size = 0x4, scoped, tag = 'scoped memory for tpu_custom_call.1']
    #allocation4 [shape = 's32[1]{0}', space=sflag, size = 0x4, scoped, tag = 'scoped memory for tpu_custom_call.1']
    #allocation5 [shape = 'u8[434176]{0}', space=vmem, size = 0x6a000, scoped, tag = 'input window, operand 1, single buffered']
    #allocation6 [shape = 's32[1]{0}', space=sflag, size = 0x4, scoped, tag = 'scoped memory for tpu_custom_call.1']
    #allocation7 [shape = 'u8[4096]{0}', space=vmem, size = 0x1000, scoped, tag = 'output window, operand 0, single buffered']
    %7 = vsyncpa [#allocation3], 0
    %8 = vsyncpa [#allocation6], 0
    %9 = vsyncpa [#allocation4], 0
    // Predicated region
    $region2: #{tpu_custom_call.1} parent=1 // pred_check
      _
    $region3: #{tpu_custom_call.1} parent=1 // pred_check_branch
      %11 = sbr.rel (0) target = $region5
    $region4: #{tpu_custom_call.1} parent=1 // pred_region
      %s13 = ssub.s32 128, 128
      %14 = vsyncadd [#allocation3], %s13
      %s16 = sshll.u32 [#allocation2], 4
      %s17 = int_to_ptr.vmem [resolvable:$true] %s16
      %19 = dma.hbm_to_vmem [thread:$0]  %s0, 128, %s17, [#allocation3]
    $region5: #{tpu_custom_call.1} parent=1 // pred_fallthru
      _
    // Predicated region
    $region6: #{tpu_custom_call.1} parent=1 // pred_check
      _
    $region7: #{tpu_custom_call.1} parent=1 // pred_check_branch
      %21 = sbr.rel (0) target = $region9
    $region8: #{tpu_custom_call.1} parent=1 // pred_region
      %s23 = ssub.s32 13568, 13568
      %24 = vsyncadd [#allocation6], %s23
      %s25 = sshll.u32 [#allocation5], 4
      %s26 = int_to_ptr.vmem [resolvable:$true] %s25
      %31 = dma.hbm_to_vmem [thread:$0]  %s1, 13568, %s26, [#allocation6], 256, 256, 16
    $region9: #{tpu_custom_call.1} parent=1 // pred_fallthru
      _
    // Predicated region
    $region10: #{tpu_custom_call.1} parent=1 // pred_check
      _
    $region11: #{tpu_custom_call.1} parent=1 // pred_check_branch
      %33 = sbr.rel (0) target = $region13
    $region12: #{tpu_custom_call.1} parent=1 // pred_region
      %34 = dma.done [#allocation3], 128
    $region13: #{tpu_custom_call.1} parent=1 // pred_fallthru
      _
    // Predicated region
    $region14: #{tpu_custom_call.1} parent=1 // pred_check
      _
    $region15: #{tpu_custom_call.1} parent=1 // pred_check_branch
      %36 = sbr.rel (0) target = $region17
    $region16: #{tpu_custom_call.1} parent=1 // pred_region
      %37 = dma.done [#allocation6], 13568
    $region17: #{tpu_custom_call.1} parent=1 // pred_fallthru
      _
    %v38 = vld [vmem:[#allocation2] sm:$0xff]
    %v39 = vld [vmem:[#allocation5] sm:$0xff]
    %v40 = vld [vmem:[#allocation5 + $0x8] sm:$0xff]
    %v41 = vld [vmem:[#allocation5 + $0x10] sm:$0xff]
    %v42 = vld [vmem:[#allocation5 + $0x18] sm:$0xff]
    %s43 = scalar_lea.vmem [#allocation5], 32
    %v44 = vld [vmem:[%s43] ss:$8 sm:$0x3]
    %v45 = vld [vmem:[#allocation5 + $0x30] sm:$0xff]
    %v46 = vld [vmem:[#allocation5 + $0x40] sm:$0xff]
    %v47 = vld [vmem:[#allocation5 + $0x50] sm:$0xff]
    %v48 = vld [vmem:[#allocation5 + $0x60] sm:$0xff]
    %v49 = vld [vmem:[#allocation5 + $0x70] sm:$0xff]
    %v50 = vld [vmem:[#allocation5 + $0x80] sm:$0xff]
    %v51 = vld [vmem:[#allocation5 + $0x90] sm:$0xff]
    %v52 = vld [vmem:[#allocation5 + $0xa0] sm:$0xff]
    %v53 = vld [vmem:[#allocation5 + $0xb0] sm:$0xff]
    %v54 = vld [vmem:[#allocation5 + $0xc0] sm:$0xff]
    %v55 = vld [vmem:[#allocation5 + $0xd0] sm:$0xff]
    %v56 = vld [vmem:[#allocation5 + $0xe0] sm:$0xff]
    %v57 = vld [vmem:[#allocation5 + $0xf0] sm:$0xff]
    %v58 = vld [vmem:[#allocation5 + $0x100] sm:$0xff]
    %v59 = vld [vmem:[#allocation5 + $0x110] sm:$0xff]
    %v60 = vld [vmem:[#allocation5 + $0x120] sm:$0xff]
    %v61 = vld [vmem:[#allocation5 + $0x130] sm:$0xff]
    %v62 = vld [vmem:[#allocation5 + $0x140] sm:$0xff]
    %v63 = vld [vmem:[#allocation5 + $0x150] sm:$0xff]
    %v64 = vld [vmem:[#allocation5 + $0x160] sm:$0xff]
    %v65 = vld [vmem:[#allocation5 + $0x170] sm:$0xff]
    %v66 = vld [vmem:[#allocation5 + $0x180] sm:$0xff]
    %v67 = vld [vmem:[#allocation5 + $0x190] sm:$0xff]
    %v68 = vld [vmem:[#allocation5 + $0x1a0] sm:$0xff]
    %v69 = vld [vmem:[#allocation5 + $0x1b0] sm:$0xff]
    %v70 = vld [vmem:[#allocation5 + $0x1c0] sm:$0xff]
    %v71 = vld [vmem:[#allocation5 + $0x1d0] sm:$0xff]
    %v72 = vld [vmem:[#allocation5 + $0x1e0] sm:$0xff]
    %v73 = vld [vmem:[#allocation5 + $0x1f0] sm:$0xff]
    %v74 = vld [vmem:[#allocation5 + $0x200] sm:$0xff]
    %v75 = vld [vmem:[#allocation5 + $0x210] sm:$0xff]
    %v76 = vld [vmem:[#allocation5 + $0x220] sm:$0xff]
    %v77 = vld [vmem:[#allocation5 + $0x230] ss:$0 sm:$0xff]
    %v78 = vld [vmem:[#allocation5 + $0x240] sm:$0xff]
    %v79 = vld [vmem:[#allocation5 + $0x250] sm:$0xff]
    %v80 = vld [vmem:[#allocation5 + $0x260] sm:$0xff]
    %v81 = vld [vmem:[#allocation5 + $0x270] sm:$0xff]
    %v82 = vld [vmem:[#allocation5 + $0x280] sm:$0xff]
    %v83 = vld [vmem:[#allocation5 + $0x290] sm:$0xff]
    %v84 = vld [vmem:[#allocation5 + $0x2a0] sm:$0xff]
    %v85 = vld [vmem:[#allocation5 + $0x2b0] sm:$0xff]
    %v86 = vld [vmem:[#allocation5 + $0x2c0] sm:$0xff]
    %v87 = vld [vmem:[#allocation5 + $0x2d0] sm:$0xff]
    %v88 = vld [vmem:[#allocation5 + $0x2e0] sm:$0xff]
    %v89 = vld [vmem:[#allocation5 + $0x2f0] sm:$0xff]
    %v90 = vld [vmem:[#allocation5 + $0x300] sm:$0xff]
    %v91 = vld [vmem:[#allocation5 + $0x310] sm:$0xff]
    %v92 = vld [vmem:[#allocation5 + $0x320] sm:$0xff]
    %v93 = vld [vmem:[#allocation5 + $0x330] sm:$0xff]
    %v94 = vld [vmem:[#allocation5 + $0x340] ss:$0 sm:$0xff]
    %v96 = vlaneseq
    %v97 = vshrl.u32 %v96, 7
    %v98 = vsub.s32 0, %v97
    %v99 = vrot.slane %v44, %v98
    %v100 = vlaneseq
    %v101 = vshrl.u32 %v100, 7
    %v102 = vsub.s32 1, %v101
    %v103 = vrot.slane %v44, %v102
    %vm106 = vcmask 130048
    %v108 = vsel %vm106, %v38, 0
    %110 = vmatprep.subr.mxu0 0.0
    %111 = vmatpush1.msra.mxu0 0.0
    %112 = vmatprep.subr.mxu0 0.0
    %113 = vmatpush1.msra.mxu0 0.0
    %114 = vmatprep.subr.mxu0 0.0
    %115 = vmatpush1.msra.mxu0 0.0
    %116 = vmatprep.subr.mxu0 0.0
    %117 = vmatpush1.msra.mxu0 0.0
    %118 = vmatprep.subr.mxu0 0.0
    %119 = vmatpush1.msra.mxu0 0.0
    %120 = vmatprep.subr.mxu0 0.0
    %121 = vmatpush1.msra.mxu0 0.0
    %122 = vmatprep.subr.mxu0 0.0
    %123 = vmatpush1.msra.mxu0 0.0
    %124 = vmatprep.subr.mxu0 0.0
    %125 = vmatpush1.msra.mxu0 0.0
    %126 = vmatprep.subr.mxu0 0.0
    %127 = vmatpush1.msra.mxu0 0.0
    %128 = vmatprep.subr.mxu0 0.0
    %129 = vmatpush1.msra.mxu0 0.0
    %130 = vmatprep.subr.mxu0 0.0
    %131 = vmatpush1.msra.mxu0 0.0
    %132 = vmatprep.subr.mxu0 0.0
    %133 = vmatpush1.msra.mxu0 0.0
    %134 = vmatprep.subr.mxu0 0.0
    %135 = vmatpush1.msra.mxu0 0.0
    %136 = vmatprep.subr.mxu0 0.0
    %137 = vmatpush1.msra.mxu0 0.0
    %138 = vmatprep.subr.mxu0 %v42
    %139 = vmatpush1.msra.mxu0 %v41
    %140 = vmatprep.subr.mxu0 %v40
    %141 = vmatpush1.msra.mxu0 %v39
    %142 = vmatprep.subr.mxu0 0.0
    %143 = vmatpush2.msra.mxu0 0.0
    %144 = vmatprep.subr.mxu0 0.0
    %145 = vmatpush2.msra.mxu0 0.0
    %146 = vmatprep.subr.mxu0 0.0
    %147 = vmatpush2.msra.mxu0 0.0
    %148 = vmatprep.subr.mxu0 0.0
    %149 = vmatpush2.msra.mxu0 0.0
    %150 = vmatprep.subr.mxu0 0.0
    %151 = vmatpush2.msra.mxu0 0.0
    %152 = vmatprep.subr.mxu0 0.0
    %153 = vmatpush2.msra.mxu0 0.0
    %154 = vmatprep.subr.mxu0 0.0
    %155 = vmatpush2.msra.mxu0 0.0
    %156 = vmatprep.subr.mxu0 0.0
    %157 = vmatpush2.msra.mxu0 0.0
    %158 = vmatprep.subr.mxu0 0.0
    %159 = vmatpush2.msra.mxu0 0.0
    %160 = vmatprep.subr.mxu0 0.0
    %161 = vmatpush2.msra.mxu0 0.0
    %162 = vmatprep.subr.mxu0 0.0
    %163 = vmatpush2.msra.mxu0 0.0
    %164 = vmatprep.subr.mxu0 0.0
    %165 = vmatpush2.msra.mxu0 0.0
    %166 = vmatprep.subr.mxu0 0.0
    %167 = vmatpush2.msra.mxu0 0.0
    %168 = vmatprep.subr.mxu0 0.0
    %169 = vmatpush2.msra.mxu0 0.0
    %170 = vmatprep.subr.mxu0 0.0
    %171 = vmatpush2.msra.mxu0 0.0
    %172 = vmatprep.subr.mxu0 0.0
    %173 = vmatpush2.msra.mxu0 0.0
    %174 = vmatprep.mubr.f32.mxu0 0.0
    %175 = vmatmul.mubr.f32.gmra.mxu0 %v108
    %v176 = vpop.f32.mrf.mxu0
    %v177 = vadd.f32 %v99, %v176
    %v178 = vpop.f32.mrf.mxu0
    %v179 = vadd.f32 %v103, %v178
    %180 = vdwg.mxu0
    %v181 = vtanh.pop %v177
    %v182 = vtanh.pop %v179
    %183 = vmatprep.subr.mxu0 0.0
    %184 = vmatpush1.msra.mxu0 %v60
    %185 = vmatprep.subr.mxu0 0.0
    %186 = vmatpush1.msra.mxu0 %v59
    %187 = vmatprep.subr.mxu0 0.0
    %188 = vmatpush1.msra.mxu0 %v58
    %189 = vmatprep.subr.mxu0 0.0
    %190 = vmatpush1.msra.mxu0 %v57
    %191 = vmatprep.subr.mxu0 0.0
    %192 = vmatpush1.msra.mxu0 %v56
    %193 = vmatprep.subr.mxu0 0.0
    %194 = vmatpush1.msra.mxu0 %v55
    %195 = vmatprep.subr.mxu0 0.0
    %196 = vmatpush1.msra.mxu0 %v54
    %197 = vmatprep.subr.mxu0 0.0
    %198 = vmatpush1.msra.mxu0 %v53
    %199 = vmatprep.subr.mxu0 0.0
    %200 = vmatpush1.msra.mxu0 %v52
    %201 = vmatprep.subr.mxu0 0.0
    %202 = vmatpush1.msra.mxu0 %v51
    %203 = vmatprep.subr.mxu0 0.0
    %204 = vmatpush1.msra.mxu0 %v50
    %205 = vmatprep.subr.mxu0 0.0
    %206 = vmatpush1.msra.mxu0 %v49
    %207 = vmatprep.subr.mxu0 0.0
    %208 = vmatpush1.msra.mxu0 %v48
    %209 = vmatprep.subr.mxu0 0.0
    %210 = vmatpush1.msra.mxu0 %v47
    %211 = vmatprep.subr.mxu0 0.0
    %212 = vmatpush1.msra.mxu0 %v46
    %213 = vmatprep.subr.mxu0 0.0
    %214 = vmatpush1.msra.mxu0 %v45
    %215 = vmatprep.subr.mxu0 0.0
    %216 = vmatpush2.msra.mxu0 %v76
    %217 = vmatprep.subr.mxu0 0.0
    %218 = vmatpush2.msra.mxu0 %v75
    %219 = vmatprep.subr.mxu0 0.0
    %220 = vmatpush2.msra.mxu0 %v74
    %221 = vmatprep.subr.mxu0 0.0
    %222 = vmatpush2.msra.mxu0 %v73
    %223 = vmatprep.subr.mxu0 0.0
    %224 = vmatpush2.msra.mxu0 %v72
    %225 = vmatprep.subr.mxu0 0.0
    %226 = vmatpush2.msra.mxu0 %v71
    %227 = vmatprep.subr.mxu0 0.0
    %228 = vmatpush2.msra.mxu0 %v70
    %229 = vmatprep.subr.mxu0 0.0
    %230 = vmatpush2.msra.mxu0 %v69
    %231 = vmatprep.subr.mxu0 0.0
    %232 = vmatpush2.msra.mxu0 %v68
    %233 = vmatprep.subr.mxu0 0.0
    %234 = vmatpush2.msra.mxu0 %v67
    %235 = vmatprep.subr.mxu0 0.0
    %236 = vmatpush2.msra.mxu0 %v66
    %237 = vmatprep.subr.mxu0 0.0
    %238 = vmatpush2.msra.mxu0 %v65
    %239 = vmatprep.subr.mxu0 0.0
    %240 = vmatpush2.msra.mxu0 %v64
    %241 = vmatprep.subr.mxu0 0.0
    %242 = vmatpush2.msra.mxu0 %v63
    %243 = vmatprep.subr.mxu0 0.0
    %244 = vmatpush2.msra.mxu0 %v62
    %245 = vmatprep.subr.mxu0 0.0
    %246 = vmatpush2.msra.mxu0 %v61
    %247 = vmatprep.mubr.f32.mxu0 %v182
    %248 = vmatmul.mubr.f32.gmra.mxu0 %v181
    %v249 = vpop.f32.mrf.mxu0
    %v250 = vadd.f32 %v77, %v249
    %v251 = vpop.f32.mrf.mxu0
    %252 = vdwg.mxu0
    %v253 = vtanh.pop %v250
    %254 = vmatprep.subr.mxu0 0.0
    %255 = vmatpush1.msra.mxu0 %v93
    %256 = vmatprep.subr.mxu0 0.0
    %257 = vmatpush1.msra.mxu0 %v92
    %258 = vmatprep.subr.mxu0 0.0
    %259 = vmatpush1.msra.mxu0 %v91
    %260 = vmatprep.subr.mxu0 0.0
    %261 = vmatpush1.msra.mxu0 %v90
    %262 = vmatprep.subr.mxu0 0.0
    %263 = vmatpush1.msra.mxu0 %v89
    %264 = vmatprep.subr.mxu0 0.0
    %265 = vmatpush1.msra.mxu0 %v88
    %266 = vmatprep.subr.mxu0 0.0
    %267 = vmatpush1.msra.mxu0 %v87
    %268 = vmatprep.subr.mxu0 0.0
    %269 = vmatpush1.msra.mxu0 %v86
    %270 = vmatprep.subr.mxu0 0.0
    %271 = vmatpush1.msra.mxu0 %v85
    %272 = vmatprep.subr.mxu0 0.0
    %273 = vmatpush1.msra.mxu0 %v84
    %274 = vmatprep.subr.mxu0 0.0
    %275 = vmatpush1.msra.mxu0 %v83
    %276 = vmatprep.subr.mxu0 0.0
    %277 = vmatpush1.msra.mxu0 %v82
    %278 = vmatprep.subr.mxu0 0.0
    %279 = vmatpush1.msra.mxu0 %v81
    %280 = vmatprep.subr.mxu0 0.0
    %281 = vmatpush1.msra.mxu0 %v80
    %282 = vmatprep.subr.mxu0 0.0
    %283 = vmatpush1.msra.mxu0 %v79
    %284 = vmatprep.subr.mxu0 0.0
    %285 = vmatpush1.msra.mxu0 %v78
    %286 = vmatprep.subr.mxu0 0.0
    %287 = vmatpush2.msra.mxu0 0.0
    %288 = vmatprep.subr.mxu0 0.0
    %289 = vmatpush2.msra.mxu0 0.0
    %290 = vmatprep.subr.mxu0 0.0
    %291 = vmatpush2.msra.mxu0 0.0
    %292 = vmatprep.subr.mxu0 0.0
    %293 = vmatpush2.msra.mxu0 0.0
    %294 = vmatprep.subr.mxu0 0.0
    %295 = vmatpush2.msra.mxu0 0.0
    %296 = vmatprep.subr.mxu0 0.0
    %297 = vmatpush2.msra.mxu0 0.0
    %298 = vmatprep.subr.mxu0 0.0
    %299 = vmatpush2.msra.mxu0 0.0
    %300 = vmatprep.subr.mxu0 0.0
    %301 = vmatpush2.msra.mxu0 0.0
    %302 = vmatprep.subr.mxu0 0.0
    %303 = vmatpush2.msra.mxu0 0.0
    %304 = vmatprep.subr.mxu0 0.0
    %305 = vmatpush2.msra.mxu0 0.0
    %306 = vmatprep.subr.mxu0 0.0
    %307 = vmatpush2.msra.mxu0 0.0
    %308 = vmatprep.subr.mxu0 0.0
    %309 = vmatpush2.msra.mxu0 0.0
    %310 = vmatprep.subr.mxu0 0.0
    %311 = vmatpush2.msra.mxu0 0.0
    %312 = vmatprep.subr.mxu0 0.0
    %313 = vmatpush2.msra.mxu0 0.0
    %314 = vmatprep.subr.mxu0 0.0
    %315 = vmatpush2.msra.mxu0 0.0
    %316 = vmatprep.subr.mxu0 0.0
    %317 = vmatpush2.msra.mxu0 0.0
    %318 = vmatprep.mubr.f32.mxu0 0.0
    %319 = vmatmul.mubr.f32.gmra.mxu0 %v253
    %v320 = vpop.f32.mrf.mxu0
    %v321 = vadd.f32 %v94, %v320
    %v322 = vpop.f32.mrf.mxu0
    %323 = vdwg.mxu0
    %v324 = vlaneseq
    %v325 = vand.u32 %v324, 127
    %vm326 = vcmp.lt.s32.totalorder %v325, 4
    %v327 = vtanh.pop %v321
    %v328 = vsel %vm326, %v327, %v321
    %329 = vst [vmem:[#allocation7] sm:$0xff] %v328
    // Predicated region
    $region18: #{tpu_custom_call.1} parent=1 // pred_check
      _
    $region19: #{tpu_custom_call.1} parent=1 // pred_check_branch
      %331 = sbr.rel (0) target = $region21
    $region20: #{tpu_custom_call.1} parent=1 // pred_region
      %s333 = ssub.s32 128, 128
      %334 = vsyncadd [#allocation4], %s333
      %s336 = sshll.u32 [#allocation7], 4
      %s337 = int_to_ptr.vmem [resolvable:$true] %s336
      %339 = dma.vmem_to_hbm [thread:$0]  %s337, 128, %s2, [#allocation4]
    $region21: #{tpu_custom_call.1} parent=1 // pred_fallthru
      _
    // Predicated region
    $region22: #{tpu_custom_call.1} parent=1 // pred_check
      _
    $region23: #{tpu_custom_call.1} parent=1 // pred_check_branch
      %341 = sbr.rel (0) target = $region25
    $region24: #{tpu_custom_call.1} parent=1 // pred_region
      %342 = dma.done [#allocation4], 128
    $region25: #{tpu_custom_call.1} parent=1 // pred_fallthru
      _
    %343 = vsyncpa [#allocation3], 1
    %344 = vsyncpa [#allocation6], 1
    %345 = vsyncpa [#allocation4], 1

</llo_original>
